<compile_context>
chip_gen: v5e
topology: v5e:2x2
jax: 0.10.0
libtpu: 0.0.40
codegen_flags: <defaults>
</compile_context>

<pallas_src>
import functools

import jax
import jax.numpy as jnp
from jax.experimental import pallas as pl
from jax.experimental.pallas import tpu as pltpu

LN_EPS = 1e-5


def rnd_kernel(x_ref,
               w1_ref, b1_ref, g1_ref, be1_ref,
               w2_ref, b2_ref, g2_ref, be2_ref,
               w3_ref, b3_ref,
               o_ref):
    x = x_ref[...]

    def linear(h, w_ref, b_ref):
        # Matmul operands may be bf16 (v6e/v7x fast path); accumulate in f32.
        return (jnp.dot(h.astype(w_ref.dtype), w_ref[...],
                        preferred_element_type=jnp.float32)
                + b_ref[...].astype(jnp.float32))

    def layernorm_relu(h, g_ref, be_ref):
        # Single-pass LayerNorm stats: both reductions run on `h`, so the two
        # XLU reduces are independent and can overlap other work.
        n = h.shape[-1]
        inv_n = 1.0 / n
        s1 = jnp.sum(h, axis=-1, keepdims=True)
        s2 = jnp.sum(h * h, axis=-1, keepdims=True)
        mu = s1 * inv_n
        var = jnp.maximum(s2 * inv_n - mu * mu, 0.0)
        h = (h - mu) * jax.lax.rsqrt(var + LN_EPS)
        h = h * g_ref[...].astype(jnp.float32) + be_ref[...].astype(jnp.float32)
        # ReLU (kept in f32 for v5e's VPU, which has no bf16 path).
        return jnp.maximum(h, 0.0)

    h = layernorm_relu(linear(x, w1_ref, b1_ref), g1_ref, be1_ref)
    h = layernorm_relu(linear(h, w2_ref, b2_ref), g2_ref, be2_ref)
    out = linear(h, w3_ref, b3_ref)
    o_ref[...] = out.astype(o_ref.dtype)


@functools.partial(jax.jit, static_argnames=("tile_b", "use_bf16"))
def rnd_forward(x, params, *, tile_b=256, use_bf16=False):
    """Fused RND MLP forward, tiled over the batch dimension."""
    (w1, b1, g1, be1, w2, b2, g2, be2, w3, b3) = params
    B, d_in = x.shape
    hid1 = w1.shape[1]
    hid2 = w2.shape[1]
    out_dim = w3.shape[1]

    if use_bf16:
        # Native MXU path on v6e/v7x; loosens the f32-reference match.
        w1, w2, w3 = (w.astype(jnp.bfloat16) for w in (w1, w2, w3))

    # Effective batch tile: multiple of 8 (sublane), capped by tile_b.
    b_round8 = ((B + 7) // 8) * 8
    tb = min(tile_b, b_round8)
    b_pad = pl.cdiv(B, tb) * tb
    if b_pad != B:
        x = jnp.pad(x, ((0, b_pad - B), (0, 0)))
    grid = (b_pad // tb,)

    x_spec = pl.BlockSpec((tb, d_in), lambda i: (i, 0))
    out_spec = pl.BlockSpec((tb, out_dim), lambda i: (i, 0))

    def const_spec(a):
        # Whole array, same block for every grid step -> stays VMEM-resident.
        return pl.BlockSpec(a.shape, lambda i, _nd=a.ndim: (0,) * _nd)

    resident = (w1, b1, g1, be1, w2, b2, g2, be2, w3, b3)
    weight_bytes = sum(int(p.size) * p.dtype.itemsize for p in resident)

    # Cost hint for XLA's scheduler around the custom call.
    flops = 2 * b_pad * (d_in * hid1 + hid1 * hid2 + hid2 * out_dim)
    bytes_accessed = (int(x.size) * x.dtype.itemsize
                      + weight_bytes
                      + b_pad * out_dim * 4)
    cost = pl.CostEstimate(flops=flops, transcendentals=0,
                           bytes_accessed=bytes_accessed)

    # VMEM budget: double-buffered x/out tiles + resident params + per-tile
    # f32 intermediates, plus slack.  Cap well under v7x's 64 MiB physical.
    tile_bytes = (tb * (d_in + out_dim) * x.dtype.itemsize
                  + tb * (hid1 + hid2) * 4)
    vmem_limit = min(2 * weight_bytes + 6 * tile_bytes + (4 << 20), 32 << 20)

    out = pl.pallas_call(
        rnd_kernel,
        out_shape=jax.ShapeDtypeStruct((b_pad, out_dim), jnp.float32),
        grid=grid,
        in_specs=[x_spec] + [const_spec(p) for p in resident],
        out_specs=out_spec,
        compiler_params=pltpu.CompilerParams(
            dimension_semantics=("parallel",),
            vmem_limit_bytes=int(vmem_limit)),
        cost_estimate=cost,
    )(x, *resident)

    return out[:B] if b_pad != B else out


def init_params(key, input_dim, hidden_sizes=(256, 256), output_dim=128):
    """Matches weights_init_:
       - Linear: xavier_uniform weight, zero bias (out_features != 1 here).
       - LayerNorm: weight=1, bias=0.
       Weights are stored as (in, out)."""
    sizes = [input_dim] + list(hidden_sizes) + [output_dim]
    params = []
    keys = jax.random.split(key, len(sizes) - 1)
    for li, (fan_in, fan_out) in enumerate(zip(sizes[:-1], sizes[1:])):
        bound = jnp.sqrt(6.0 / (fan_in + fan_out))
        w = jax.random.uniform(keys[li], (fan_in, fan_out),
                               minval=-bound, maxval=bound, dtype=jnp.float32)
        b = jnp.zeros((1, fan_out), dtype=jnp.float32)
        params.append(w)
        params.append(b)
        if li < len(hidden_sizes):  # hidden layers have LayerNorm params
            params.append(jnp.ones((1, fan_out), dtype=jnp.float32))   # gamma
            params.append(jnp.zeros((1, fan_out), dtype=jnp.float32))  # beta
    return tuple(params)


def reference_forward(x, params):
    """Pure-JAX reference of the same forward pass (for sanity check)."""
    (w1, b1, g1, be1, w2, b2, g2, be2, w3, b3) = params

    def ln(h, g, be):
        mu = jnp.mean(h, axis=-1, keepdims=True)
        var = jnp.mean((h - mu) ** 2, axis=-1, keepdims=True)
        return (h - mu) / jnp.sqrt(var + LN_EPS) * g + be

    h = jnp.maximum(ln(x @ w1 + b1, g1, be1), 0.0)
    h = jnp.maximum(ln(h @ w2 + b2, g2, be2), 0.0)
    return h @ w3 + b3


if __name__ == "__main__":
    key = jax.random.PRNGKey(0)
    k_x1, k_x2, k_p = jax.random.split(key, 3)

    # Shapes consistent with the module: input_dim=(32,), hidden=[256,256], out=128.
    D_IN = 32
    params = init_params(k_p, D_IN, hidden_sizes=(256, 256), output_dim=128)

    # Case 1: tiny batch (B=8) -> single-step grid.
    x1 = jax.random.normal(k_x1, (8, D_IN), dtype=jnp.float32)
    out1 = jax.block_until_ready(rnd_forward(x1, params))
    ref1 = reference_forward(x1, params)
    assert out1.shape == (8, 128), out1.shape
    assert jnp.allclose(out1, ref1, atol=1e-4, rtol=1e-4), "mismatch (B=8)"

    # Case 2: batch that exercises tiling + padding (B=200, tile=64 -> grid of 4).
    x2 = jax.random.normal(k_x2, (200, D_IN), dtype=jnp.float32)
    out2 = jax.block_until_ready(rnd_forward(x2, params, tile_b=64))
    ref2 = reference_forward(x2, params)
    assert out2.shape == (200, 128), out2.shape
    assert jnp.allclose(out2, ref2, atol=1e-4, rtol=1e-4), "mismatch (B=200)"

    print("KERNEL_OK")
</pallas_src>

<mosaic_0001>
module attributes {stable_mosaic.version = 11 : i64} {
  func.func @rnd_kernel(%arg0: i32, %arg1: memref<8x32xf32, #tpu.memory_space<vmem>>, %arg2: memref<32x256xf32, #tpu.memory_space<vmem>>, %arg3: memref<1x256xf32, #tpu.memory_space<vmem>>, %arg4: memref<1x256xf32, #tpu.memory_space<vmem>>, %arg5: memref<1x256xf32, #tpu.memory_space<vmem>>, %arg6: memref<256x256xf32, #tpu.memory_space<vmem>>, %arg7: memref<1x256xf32, #tpu.memory_space<vmem>>, %arg8: memref<1x256xf32, #tpu.memory_space<vmem>>, %arg9: memref<1x256xf32, #tpu.memory_space<vmem>>, %arg10: memref<256x128xf32, #tpu.memory_space<vmem>>, %arg11: memref<1x128xf32, #tpu.memory_space<vmem>>, %arg12: memref<8x128xf32, #tpu.memory_space<vmem>>) attributes {dimension_semantics = [#tpu.dimension_semantics<parallel>], iteration_bounds = array<i64: 1>, scalar_prefetch = 0 : i64, scratch_operands = 0 : i64, tpu.core_type = #tpu.core_type<tc>, window_params = [{transform_indices = @transform_0, window_bounds = array<i64: 8, 32>}, {pipeline_mode = #tpu.pipeline_mode<synchronous>, transform_indices = @transform_1, window_bounds = array<i64: 32, 256>}, {pipeline_mode = #tpu.pipeline_mode<synchronous>, transform_indices = @transform_2, window_bounds = array<i64: 1, 256>}, {pipeline_mode = #tpu.pipeline_mode<synchronous>, transform_indices = @transform_3, window_bounds = array<i64: 1, 256>}, {pipeline_mode = #tpu.pipeline_mode<synchronous>, transform_indices = @transform_4, window_bounds = array<i64: 1, 256>}, {pipeline_mode = #tpu.pipeline_mode<synchronous>, transform_indices = @transform_5, window_bounds = array<i64: 256, 256>}, {pipeline_mode = #tpu.pipeline_mode<synchronous>, transform_indices = @transform_6, window_bounds = array<i64: 1, 256>}, {pipeline_mode = #tpu.pipeline_mode<synchronous>, transform_indices = @transform_7, window_bounds = array<i64: 1, 256>}, {pipeline_mode = #tpu.pipeline_mode<synchronous>, transform_indices = @transform_8, window_bounds = array<i64: 1, 256>}, {pipeline_mode = #tpu.pipeline_mode<synchronous>, transform_indices = @transform_9, window_bounds = array<i64: 256, 128>}, {pipeline_mode = #tpu.pipeline_mode<synchronous>, transform_indices = @transform_10, window_bounds = array<i64: 1, 128>}, {transform_indices = @transform_11, window_bounds = array<i64: 8, 128>}]} {
    %c0 = arith.constant 0 : index
    %c0_0 = arith.constant 0 : index
    %0 = vector.load %arg1[%c0, %c0_0] : memref<8x32xf32, #tpu.memory_space<vmem>>, vector<8x32xf32>
    %c0_1 = arith.constant 0 : index
    %c0_2 = arith.constant 0 : index
    %1 = vector.load %arg2[%c0_1, %c0_2] : memref<32x256xf32, #tpu.memory_space<vmem>>, vector<32x256xf32>
    %cst = arith.constant dense<0.000000e+00> : vector<8x256xf32>
    %2 = tpu.matmul %0, %1, %cst {dimension_numbers = #tpu.dot_dimension_numbers<[1], [0], [0], [1], [0, 0, 1, 1], [], []>} : vector<8x32xf32>, vector<32x256xf32>, vector<8x256xf32> -> vector<8x256xf32>
    %c0_3 = arith.constant 0 : index
    %c0_4 = arith.constant 0 : index
    %3 = vector.load %arg3[%c0_3, %c0_4] : memref<1x256xf32, #tpu.memory_space<vmem>>, vector<1x256xf32>
    %4 = vector.broadcast %3 : vector<1x256xf32> to vector<8x256xf32>
    %5 = arith.addf %2, %4 : vector<8x256xf32>
    %cst_5 = arith.constant dense<0.000000e+00> : vector<8xf32>
    %6 = vector.multi_reduction <add>, %5, %cst_5 [1] : vector<8x256xf32> to vector<8xf32>
    %7 = vector.shape_cast %6 : vector<8xf32> to vector<8x1xf32>
    %8 = arith.mulf %5, %5 : vector<8x256xf32>
    %cst_6 = arith.constant dense<0.000000e+00> : vector<8xf32>
    %9 = vector.multi_reduction <add>, %8, %cst_6 [1] : vector<8x256xf32> to vector<8xf32>
    %10 = vector.shape_cast %9 : vector<8xf32> to vector<8x1xf32>
    %cst_7 = arith.constant 3.906250e-03 : f32
    %11 = vector.broadcast %cst_7 : f32 to vector<8x1xf32>
    %12 = arith.mulf %7, %11 : vector<8x1xf32>
    %cst_8 = arith.constant 3.906250e-03 : f32
    %13 = vector.broadcast %cst_8 : f32 to vector<8x1xf32>
    %14 = arith.mulf %10, %13 : vector<8x1xf32>
    %15 = arith.mulf %12, %12 : vector<8x1xf32>
    %16 = arith.subf %14, %15 : vector<8x1xf32>
    %cst_9 = arith.constant 0.000000e+00 : f32
    %17 = vector.broadcast %cst_9 : f32 to vector<8x1xf32>
    %18 = arith.maximumf %16, %17 : vector<8x1xf32>
    %19 = vector.broadcast %12 : vector<8x1xf32> to vector<8x256xf32>
    %20 = arith.subf %5, %19 : vector<8x256xf32>
    %cst_10 = arith.constant 9.99999974E-6 : f32
    %21 = vector.broadcast %cst_10 : f32 to vector<8x1xf32>
    %22 = arith.addf %18, %21 : vector<8x1xf32>
    %23 = math.rsqrt %22 : vector<8x1xf32>
    %24 = vector.broadcast %23 : vector<8x1xf32> to vector<8x256xf32>
    %25 = arith.mulf %20, %24 : vector<8x256xf32>
    %c0_11 = arith.constant 0 : index
    %c0_12 = arith.constant 0 : index
    %26 = vector.load %arg4[%c0_11, %c0_12] : memref<1x256xf32, #tpu.memory_space<vmem>>, vector<1x256xf32>
    %27 = vector.broadcast %26 : vector<1x256xf32> to vector<8x256xf32>
    %28 = arith.mulf %25, %27 : vector<8x256xf32>
    %c0_13 = arith.constant 0 : index
    %c0_14 = arith.constant 0 : index
    %29 = vector.load %arg5[%c0_13, %c0_14] : memref<1x256xf32, #tpu.memory_space<vmem>>, vector<1x256xf32>
    %30 = vector.broadcast %29 : vector<1x256xf32> to vector<8x256xf32>
    %31 = arith.addf %28, %30 : vector<8x256xf32>
    %cst_15 = arith.constant 0.000000e+00 : f32
    %32 = vector.broadcast %cst_15 : f32 to vector<8x256xf32>
    %33 = arith.maximumf %31, %32 : vector<8x256xf32>
    %c0_16 = arith.constant 0 : index
    %c0_17 = arith.constant 0 : index
    %34 = vector.load %arg6[%c0_16, %c0_17] : memref<256x256xf32, #tpu.memory_space<vmem>>, vector<256x256xf32>
    %cst_18 = arith.constant dense<0.000000e+00> : vector<8x256xf32>
    %35 = tpu.matmul %33, %34, %cst_18 {dimension_numbers = #tpu.dot_dimension_numbers<[1], [0], [0], [1], [0, 0, 1, 1], [], []>} : vector<8x256xf32>, vector<256x256xf32>, vector<8x256xf32> -> vector<8x256xf32>
    %c0_19 = arith.constant 0 : index
    %c0_20 = arith.constant 0 : index
    %36 = vector.load %arg7[%c0_19, %c0_20] : memref<1x256xf32, #tpu.memory_space<vmem>>, vector<1x256xf32>
    %37 = vector.broadcast %36 : vector<1x256xf32> to vector<8x256xf32>
    %38 = arith.addf %35, %37 : vector<8x256xf32>
    %cst_21 = arith.constant dense<0.000000e+00> : vector<8xf32>
    %39 = vector.multi_reduction <add>, %38, %cst_21 [1] : vector<8x256xf32> to vector<8xf32>
    %40 = vector.shape_cast %39 : vector<8xf32> to vector<8x1xf32>
    %41 = arith.mulf %38, %38 : vector<8x256xf32>
    %cst_22 = arith.constant dense<0.000000e+00> : vector<8xf32>
    %42 = vector.multi_reduction <add>, %41, %cst_22 [1] : vector<8x256xf32> to vector<8xf32>
    %43 = vector.shape_cast %42 : vector<8xf32> to vector<8x1xf32>
    %cst_23 = arith.constant 3.906250e-03 : f32
    %44 = vector.broadcast %cst_23 : f32 to vector<8x1xf32>
    %45 = arith.mulf %40, %44 : vector<8x1xf32>
    %cst_24 = arith.constant 3.906250e-03 : f32
    %46 = vector.broadcast %cst_24 : f32 to vector<8x1xf32>
    %47 = arith.mulf %43, %46 : vector<8x1xf32>
    %48 = arith.mulf %45, %45 : vector<8x1xf32>
    %49 = arith.subf %47, %48 : vector<8x1xf32>
    %cst_25 = arith.constant 0.000000e+00 : f32
    %50 = vector.broadcast %cst_25 : f32 to vector<8x1xf32>
    %51 = arith.maximumf %49, %50 : vector<8x1xf32>
    %52 = vector.broadcast %45 : vector<8x1xf32> to vector<8x256xf32>
    %53 = arith.subf %38, %52 : vector<8x256xf32>
    %cst_26 = arith.constant 9.99999974E-6 : f32
    %54 = vector.broadcast %cst_26 : f32 to vector<8x1xf32>
    %55 = arith.addf %51, %54 : vector<8x1xf32>
    %56 = math.rsqrt %55 : vector<8x1xf32>
    %57 = vector.broadcast %56 : vector<8x1xf32> to vector<8x256xf32>
    %58 = arith.mulf %53, %57 : vector<8x256xf32>
    %c0_27 = arith.constant 0 : index
    %c0_28 = arith.constant 0 : index
    %59 = vector.load %arg8[%c0_27, %c0_28] : memref<1x256xf32, #tpu.memory_space<vmem>>, vector<1x256xf32>
    %60 = vector.broadcast %59 : vector<1x256xf32> to vector<8x256xf32>
    %61 = arith.mulf %58, %60 : vector<8x256xf32>
    %c0_29 = arith.constant 0 : index
    %c0_30 = arith.constant 0 : index
    %62 = vector.load %arg9[%c0_29, %c0_30] : memref<1x256xf32, #tpu.memory_space<vmem>>, vector<1x256xf32>
    %63 = vector.broadcast %62 : vector<1x256xf32> to vector<8x256xf32>
    %64 = arith.addf %61, %63 : vector<8x256xf32>
    %cst_31 = arith.constant 0.000000e+00 : f32
    %65 = vector.broadcast %cst_31 : f32 to vector<8x256xf32>
    %66 = arith.maximumf %64, %65 : vector<8x256xf32>
    %c0_32 = arith.constant 0 : index
    %c0_33 = arith.constant 0 : index
    %67 = vector.load %arg10[%c0_32, %c0_33] : memref<256x128xf32, #tpu.memory_space<vmem>>, vector<256x128xf32>
    %cst_34 = arith.constant dense<0.000000e+00> : vector<8x128xf32>
    %68 = tpu.matmul %66, %67, %cst_34 {dimension_numbers = #tpu.dot_dimension_numbers<[1], [0], [0], [1], [0, 0, 1, 1], [], []>} : vector<8x256xf32>, vector<256x128xf32>, vector<8x128xf32> -> vector<8x128xf32>
    %c0_35 = arith.constant 0 : index
    %c0_36 = arith.constant 0 : index
    %69 = vector.load %arg11[%c0_35, %c0_36] : memref<1x128xf32, #tpu.memory_space<vmem>>, vector<1x128xf32>
    %70 = vector.broadcast %69 : vector<1x128xf32> to vector<8x128xf32>
    %71 = arith.addf %68, %70 : vector<8x128xf32>
    %c0_37 = arith.constant 0 : index
    %c0_38 = arith.constant 0 : index
    %72 = vector.load %arg12[%c0_37, %c0_38] : memref<8x128xf32, #tpu.memory_space<vmem>>, vector<8x128xf32>
    tpu.vector_store %arg12[%c0_37, %c0_38], %71 {strides = array<i32>} : memref<8x128xf32, #tpu.memory_space<vmem>>, vector<8x128xf32>,
    return
  }
  func.func @transform_0(%arg0: i32) -> (i32, i32) {
    %c0_i32 = arith.constant 0 : i32
    %c0_i32_0 = arith.constant 0 : i32
    return %arg0, %c0_i32 : i32, i32
  }
  func.func @transform_1(%arg0: i32) -> (i32, i32) {
    %c0_i32 = arith.constant 0 : i32
    %c0_i32_0 = arith.constant 0 : i32
    %c0_i32_1 = arith.constant 0 : i32
    return %c0_i32, %c0_i32_0 : i32, i32
  }
  func.func @transform_2(%arg0: i32) -> (i32, i32) {
    %c0_i32 = arith.constant 0 : i32
    %c0_i32_0 = arith.constant 0 : i32
    %c0_i32_1 = arith.constant 0 : i32
    return %c0_i32, %c0_i32_0 : i32, i32
  }
  func.func @transform_3(%arg0: i32) -> (i32, i32) {
    %c0_i32 = arith.constant 0 : i32
    %c0_i32_0 = arith.constant 0 : i32
    %c0_i32_1 = arith.constant 0 : i32
    return %c0_i32, %c0_i32_0 : i32, i32
  }
  func.func @transform_4(%arg0: i32) -> (i32, i32) {
    %c0_i32 = arith.constant 0 : i32
    %c0_i32_0 = arith.constant 0 : i32
    %c0_i32_1 = arith.constant 0 : i32
    return %c0_i32, %c0_i32_0 : i32, i32
  }
  func.func @transform_5(%arg0: i32) -> (i32, i32) {
    %c0_i32 = arith.constant 0 : i32
    %c0_i32_0 = arith.constant 0 : i32
    %c0_i32_1 = arith.constant 0 : i32
    return %c0_i32, %c0_i32_0 : i32, i32
  }
  func.func @transform_6(%arg0: i32) -> (i32, i32) {
    %c0_i32 = arith.constant 0 : i32
    %c0_i32_0 = arith.constant 0 : i32
    %c0_i32_1 = arith.constant 0 : i32
    return %c0_i32, %c0_i32_0 : i32, i32
  }
  func.func @transform_7(%arg0: i32) -> (i32, i32) {
    %c0_i32 = arith.constant 0 : i32
    %c0_i32_0 = arith.constant 0 : i32
    %c0_i32_1 = arith.constant 0 : i32
    return %c0_i32, %c0_i32_0 : i32, i32
  }
  func.func @transform_8(%arg0: i32) -> (i32, i32) {
    %c0_i32 = arith.constant 0 : i32
    %c0_i32_0 = arith.constant 0 : i32
    %c0_i32_1 = arith.constant 0 : i32
    return %c0_i32, %c0_i32_0 : i32, i32
  }
  func.func @transform_9(%arg0: i32) -> (i32, i32) {
    %c0_i32 = arith.constant 0 : i32
    %c0_i32_0 = arith.constant 0 : i32
    %c0_i32_1 = arith.constant 0 : i32
    return %c0_i32, %c0_i32_0 : i32, i32
  }
  func.func @transform_10(%arg0: i32) -> (i32, i32) {
    %c0_i32 = arith.constant 0 : i32
    %c0_i32_0 = arith.constant 0 : i32
    %c0_i32_1 = arith.constant 0 : i32
    return %c0_i32, %c0_i32_0 : i32, i32
  }
  func.func @transform_11(%arg0: i32) -> (i32, i32) {
    %c0_i32 = arith.constant 0 : i32
    %c0_i32_0 = arith.constant 0 : i32
    return %arg0, %c0_i32 : i32, i32
  }
}

</mosaic_0001>

<llo_original>
// kernel: rnd_forward.1
$region0: #{rnd_forward.1}
  #allocation0 [shape = 'u32[]', space=smem, size = 0x4, offset = 0x4, fixed_abs, tag = 'smem constant byte address 0x4 - core index']
  #allocation1 [shape = 'u32[72,128]{1,0:T(1,128)}', space=vmem, size = 0x9000, scoped, tag = 'internal scratch']
  %s0 = inlined_call_operand.hbm [shape: f32[8,32], index: 0, kind: input, shape index: {}]
  %s1 = inlined_call_operand.hbm [shape: f32[32,256], index: 1, kind: input, shape index: {}]
  %s2 = inlined_call_operand.hbm [shape: f32[1,256], index: 2, kind: input, shape index: {}]
  %s3 = inlined_call_operand.vmem [shape: f32[1,256], index: 3, kind: input, shape index: {}]
  %s4 = inlined_call_operand.hbm [shape: f32[1,256], index: 4, kind: input, shape index: {}]
  %s5 = inlined_call_operand.hbm [shape: f32[256,256], index: 5, kind: input, shape index: {}]
  %s6 = inlined_call_operand.vmem [shape: f32[1,256], index: 6, kind: input, shape index: {}]
  %s7 = inlined_call_operand.vmem [shape: f32[1,256], index: 7, kind: input, shape index: {}]
  %s8 = inlined_call_operand.hbm [shape: f32[1,256], index: 8, kind: input, shape index: {}]
  %s9 = inlined_call_operand.hbm [shape: f32[256,128], index: 9, kind: input, shape index: {}]
  %s10 = inlined_call_operand.vmem [shape: f32[1,128], index: 10, kind: input, shape index: {}]
  %s11 = inlined_call_operand.hbm [shape: f32[8,128], index: 11, kind: output, shape index: {}]
  %s12 = sld [smem:[#allocation0]]
  $region82: #{rnd_forward.1} parent=0
    _
  %s14 = ssub.s32 1, %s12
  %s15 = scalar_select 0, %s14, %s12
  $region1: #{rnd_forward.1} parent=0
    #allocation2 [shape = 'u8[4096]{0}', space=vmem, size = 0x1000, scoped, tag = 'input window, operand 0, single buffered']
    #allocation3 [shape = 's32[1]{0}', space=sflag, size = 0x4, scoped, tag = 'scoped memory for rnd_forward.1']
    #allocation4 [shape = 's32[1]{0}', space=sflag, size = 0x4, scoped, tag = 'scoped memory for rnd_forward.1']
    #allocation5 [shape = 'u8[32768]{0}', space=vmem, size = 0x8000, scoped, tag = 'input window, operand 1, single buffered']
    #allocation6 [shape = 's32[1]{0}', space=sflag, size = 0x4, scoped, tag = 'scoped memory for rnd_forward.1']
    #allocation7 [shape = 'u8[1024]{0}', space=vmem, size = 0x400, scoped, tag = 'input window, operand 2, single buffered']
    #allocation8 [shape = 'u8[1024]{0}', space=vmem, size = 0x400, scoped, tag = 'input window, operand 4, single buffered']
    #allocation9 [shape = 's32[1]{0}', space=sflag, size = 0x4, scoped, tag = 'scoped memory for rnd_forward.1']
    #allocation10 [shape = 'u8[262144]{0}', space=vmem, size = 0x40000, scoped, tag = 'input window, operand 5, single buffered']
    #allocation11 [shape = 'u8[1024]{0}', space=vmem, size = 0x400, scoped, tag = 'input window, operand 8, single buffered']
    #allocation12 [shape = 's32[1]{0}', space=sflag, size = 0x4, scoped, tag = 'scoped memory for rnd_forward.1']
    #allocation13 [shape = 'u8[131072]{0}', space=vmem, size = 0x20000, scoped, tag = 'input window, operand 9, single buffered']
    #allocation14 [shape = 'u8[4096]{0}', space=vmem, size = 0x1000, scoped, tag = 'output window, operand 0, single buffered']
    %16 = vsyncpa [#allocation3], 0
    %17 = vsyncpa [#allocation6], 0
    %18 = vsyncpa [#allocation9], 0
    %19 = vsyncpa [#allocation12], 0
    %20 = vsyncpa [#allocation4], 0
    // Predicated region
    $region2: #{rnd_forward.1} parent=1 // pred_check
      _
    $region3: #{rnd_forward.1} parent=1 // pred_check_branch
      %22 = sbr.rel (0) target = $region5
    $region4: #{rnd_forward.1} parent=1 // pred_region
      %24 = vsyncadd [#allocation3], 0
      %s26 = sshll.u32 %s0, 4
      %s27 = int_to_ptr.hbm [resolvable:$true] %s26
      %s28 = sshll.u32 [#allocation2], 4
      %s29 = int_to_ptr.vmem [resolvable:$true] %s28
      %31 = dma.hbm_to_vmem [thread:$0]  %s27, 128, %s29, [#allocation3]
    $region5: #{rnd_forward.1} parent=1 // pred_fallthru
      _
    // Predicated region
    $region6: #{rnd_forward.1} parent=1 // pred_check
      _
    $region7: #{rnd_forward.1} parent=1 // pred_check_branch
      %33 = sbr.rel (0) target = $region9
    $region8: #{rnd_forward.1} parent=1 // pred_region
      %35 = vsyncadd [#allocation6], 0
      %s36 = sshll.u32 %s1, 4
      %s37 = int_to_ptr.hbm [resolvable:$true] %s36
      %s38 = sshll.u32 [#allocation5], 4
      %s39 = int_to_ptr.vmem [resolvable:$true] %s38
      %44 = dma.hbm_to_vmem [thread:$0]  %s37, 1024, %s39, [#allocation6], 256, 256, 16
    $region9: #{rnd_forward.1} parent=1 // pred_fallthru
      _
    // Predicated region
    $region10: #{rnd_forward.1} parent=1 // pred_check
      _
    $region11: #{rnd_forward.1} parent=1 // pred_check_branch
      %46 = sbr.rel (0) target = $region13
    $region12: #{rnd_forward.1} parent=1 // pred_region
      %48 = vsyncadd [#allocation6], 0
      %s50 = sshll.u32 %s2, 4
      %s51 = int_to_ptr.hbm [resolvable:$true] %s50
      %s52 = sshll.u32 [#allocation7], 4
      %s53 = int_to_ptr.vmem [resolvable:$true] %s52
      %55 = dma.hbm_to_vmem [thread:$0]  %s51, 32, %s53, [#allocation6]
    $region13: #{rnd_forward.1} parent=1 // pred_fallthru
      _
    // Predicated region
    $region14: #{rnd_forward.1} parent=1 // pred_check
      _
    $region15: #{rnd_forward.1} parent=1 // pred_check_branch
      %57 = sbr.rel (0) target = $region17
    $region16: #{rnd_forward.1} parent=1 // pred_region
      _
    $region17: #{rnd_forward.1} parent=1 // pred_fallthru
      _
    // Predicated region
    $region18: #{rnd_forward.1} parent=1 // pred_check
      _
    $region19: #{rnd_forward.1} parent=1 // pred_check_branch
      %59 = sbr.rel (0) target = $region21
    $region20: #{rnd_forward.1} parent=1 // pred_region
      %61 = vsyncadd [#allocation9], 0
      %s63 = sshll.u32 %s4, 4
      %s64 = int_to_ptr.hbm [resolvable:$true] %s63
      %s65 = sshll.u32 [#allocation8], 4
      %s66 = int_to_ptr.vmem [resolvable:$true] %s65
      %68 = dma.hbm_to_vmem [thread:$0]  %s64, 32, %s66, [#allocation9]
    $region21: #{rnd_forward.1} parent=1 // pred_fallthru
      _
    // Predicated region
    $region22: #{rnd_forward.1} parent=1 // pred_check
      _
    $region23: #{rnd_forward.1} parent=1 // pred_check_branch
      %70 = sbr.rel (0) target = $region25
    $region24: #{rnd_forward.1} parent=1 // pred_region
      %72 = vsyncadd [#allocation9], 0
      %s73 = sshll.u32 %s5, 4
      %s74 = int_to_ptr.hbm [resolvable:$true] %s73
      %s75 = sshll.u32 [#allocation10], 4
      %s76 = int_to_ptr.vmem [resolvable:$true] %s75
      %81 = dma.hbm_to_vmem [thread:$0]  %s74, 8192, %s76, [#allocation9], 256, 256, 16
    $region25: #{rnd_forward.1} parent=1 // pred_fallthru
      _
    // Predicated region
    $region26: #{rnd_forward.1} parent=1 // pred_check
      _
    $region27: #{rnd_forward.1} parent=1 // pred_check_branch
      %83 = sbr.rel (0) target = $region29
    $region28: #{rnd_forward.1} parent=1 // pred_region
      _
    $region29: #{rnd_forward.1} parent=1 // pred_fallthru
      _
    // Predicated region
    $region30: #{rnd_forward.1} parent=1 // pred_check
      _
    $region31: #{rnd_forward.1} parent=1 // pred_check_branch
      %85 = sbr.rel (0) target = $region33
    $region32: #{rnd_forward.1} parent=1 // pred_region
      _
    $region33: #{rnd_forward.1} parent=1 // pred_fallthru
      _
    // Predicated region
    $region34: #{rnd_forward.1} parent=1 // pred_check
      _
    $region35: #{rnd_forward.1} parent=1 // pred_check_branch
      %87 = sbr.rel (0) target = $region37
    $region36: #{rnd_forward.1} parent=1 // pred_region
      %89 = vsyncadd [#allocation12], 0
      %s91 = sshll.u32 %s8, 4
      %s92 = int_to_ptr.hbm [resolvable:$true] %s91
      %s93 = sshll.u32 [#allocation11], 4
      %s94 = int_to_ptr.vmem [resolvable:$true] %s93
      %96 = dma.hbm_to_vmem [thread:$0]  %s92, 32, %s94, [#allocation12]
    $region37: #{rnd_forward.1} parent=1 // pred_fallthru
      _
    // Predicated region
    $region38: #{rnd_forward.1} parent=1 // pred_check
      _
    $region39: #{rnd_forward.1} parent=1 // pred_check_branch
      %98 = sbr.rel (0) target = $region41
    $region40: #{rnd_forward.1} parent=1 // pred_region
      %100 = vsyncadd [#allocation12], 0
      %s101 = sshll.u32 %s9, 4
      %s102 = int_to_ptr.hbm [resolvable:$true] %s101
      %s103 = sshll.u32 [#allocation13], 4
      %s104 = int_to_ptr.vmem [resolvable:$true] %s103
      %109 = dma.hbm_to_vmem [thread:$0]  %s102, 4096, %s104, [#allocation12], 128, 128, 8
    $region41: #{rnd_forward.1} parent=1 // pred_fallthru
      _
    // Predicated region
    $region42: #{rnd_forward.1} parent=1 // pred_check
      _
    $region43: #{rnd_forward.1} parent=1 // pred_check_branch
      %111 = sbr.rel (0) target = $region45
    $region44: #{rnd_forward.1} parent=1 // pred_region
      _
    $region45: #{rnd_forward.1} parent=1 // pred_fallthru
      _
    // Predicated region
    $region46: #{rnd_forward.1} parent=1 // pred_check
      _
    $region47: #{rnd_forward.1} parent=1 // pred_check_branch
      %113 = sbr.rel (0) target = $region49
    $region48: #{rnd_forward.1} parent=1 // pred_region
      %115 = dma.done [#allocation3], 128
    $region49: #{rnd_forward.1} parent=1 // pred_fallthru
      _
    // Predicated region
    $region50: #{rnd_forward.1} parent=1 // pred_check
      _
    $region51: #{rnd_forward.1} parent=1 // pred_check_branch
      %117 = sbr.rel (0) target = $region53
    $region52: #{rnd_forward.1} parent=1 // pred_region
      %119 = dma.done [#allocation6], 1024
    $region53: #{rnd_forward.1} parent=1 // pred_fallthru
      _
    // Predicated region
    $region54: #{rnd_forward.1} parent=1 // pred_check
      _
    $region55: #{rnd_forward.1} parent=1 // pred_check_branch
      %121 = sbr.rel (0) target = $region57
    $region56: #{rnd_forward.1} parent=1 // pred_region
      %123 = dma.done [#allocation6], 32
    $region57: #{rnd_forward.1} parent=1 // pred_fallthru
      _
    // Predicated region
    $region58: #{rnd_forward.1} parent=1 // pred_check
      _
    $region59: #{rnd_forward.1} parent=1 // pred_check_branch
      %125 = sbr.rel (0) target = $region61
    $region60: #{rnd_forward.1} parent=1 // pred_region
      %127 = dma.done [#allocation9], 32
    $region61: #{rnd_forward.1} parent=1 // pred_fallthru
      _
    // Predicated region
    $region62: #{rnd_forward.1} parent=1 // pred_check
      _
    $region63: #{rnd_forward.1} parent=1 // pred_check_branch
      %129 = sbr.rel (0) target = $region65
    $region64: #{rnd_forward.1} parent=1 // pred_region
      %131 = dma.done [#allocation9], 8192
    $region65: #{rnd_forward.1} parent=1 // pred_fallthru
      _
    // Predicated region
    $region66: #{rnd_forward.1} parent=1 // pred_check
      _
    $region67: #{rnd_forward.1} parent=1 // pred_check_branch
      %133 = sbr.rel (0) target = $region69
    $region68: #{rnd_forward.1} parent=1 // pred_region
      %135 = dma.done [#allocation12], 32
    $region69: #{rnd_forward.1} parent=1 // pred_fallthru
      _
    // Predicated region
    $region70: #{rnd_forward.1} parent=1 // pred_check
      _
    $region71: #{rnd_forward.1} parent=1 // pred_check_branch
      %137 = sbr.rel (0) target = $region73
    $region72: #{rnd_forward.1} parent=1 // pred_region
      %139 = dma.done [#allocation12], 4096
    $region73: #{rnd_forward.1} parent=1 // pred_fallthru
      _
    %v140 = vld [vmem:[#allocation2] sm:$0xff]
    %v141 = vld [vmem:[#allocation5] sm:$0xff]
    %v142 = vld [vmem:[#allocation5 + $0x8] sm:$0xff]
    %v143 = vld [vmem:[#allocation5 + $0x10] sm:$0xff]
    %v144 = vld [vmem:[#allocation5 + $0x18] sm:$0xff]
    %v145 = vld [vmem:[#allocation5 + $0x20] sm:$0xff]
    %v146 = vld [vmem:[#allocation5 + $0x28] sm:$0xff]
    %v147 = vld [vmem:[#allocation5 + $0x30] sm:$0xff]
    %v148 = vld [vmem:[#allocation5 + $0x38] sm:$0xff]
    %v149 = vld [vmem:[#allocation7] sm:$0x3]
    %v151 = vperm.slane %v149, 0
    %v152 = vperm.slane %v149, 1
    %vm155 = vcmask 261120
    %v157 = vsel %vm155, %v140, 0
    %159 = vmatpush.msra.mxu0 0.0
    %160 = vmatpush.msra.mxu0 0.0
    %161 = vmatpush.msra.mxu0 0.0
    %162 = vmatpush.msra.mxu0 0.0
    %163 = vmatpush.msra.mxu0 0.0
    %164 = vmatpush.msra.mxu0 0.0
    %165 = vmatpush.msra.mxu0 0.0
    %166 = vmatpush.msra.mxu0 0.0
    %167 = vmatpush.msra.mxu0 0.0
    %168 = vmatpush.msra.mxu0 0.0
    %169 = vmatpush.msra.mxu0 0.0
    %170 = vmatpush.msra.mxu0 0.0
    %171 = vmatpush.msra.mxu0 %v147
    %172 = vmatpush.msra.mxu0 %v145
    %173 = vmatpush.msra.mxu0 %v143
    %174 = vmatpush.msra.mxu0 %v141
    %175 = vmatmul.f32.gmra.mxu0 %v157
    %v176 = vpop.f32.mrf.mxu0
    %v177 = vadd.f32 %v151, %v176
    %178 = vdwg.mxu0
    %179 = vmatpush.msra.mxu0 0.0
    %180 = vmatpush.msra.mxu0 0.0
    %181 = vmatpush.msra.mxu0 0.0
    %182 = vmatpush.msra.mxu0 0.0
    %183 = vmatpush.msra.mxu0 0.0
    %184 = vmatpush.msra.mxu0 0.0
    %185 = vmatpush.msra.mxu0 0.0
    %186 = vmatpush.msra.mxu0 0.0
    %187 = vmatpush.msra.mxu0 0.0
    %188 = vmatpush.msra.mxu0 0.0
    %189 = vmatpush.msra.mxu0 0.0
    %190 = vmatpush.msra.mxu0 0.0
    %191 = vmatpush.msra.mxu0 %v148
    %192 = vmatpush.msra.mxu0 %v146
    %193 = vmatpush.msra.mxu0 %v144
    %194 = vmatpush.msra.mxu0 %v142
    %195 = vmatmul.f32.gmra.mxu0 %v157
    %v196 = vpop.f32.mrf.mxu0
    %v197 = vadd.f32 %v152, %v196
    %198 = vdwg.mxu0
    %v199 = vadd.f32 %v177, %v197
    %200 = vadd.xlane.f32.xlu0 %v199
    %v201 = vpop.xlane.xlu0 %200
    %v202 = vmul.f32 %v177, %v177
    %v203 = vmul.f32 %v197, %v197
    %v204 = vadd.f32 %v202, %v203
    %205 = vadd.xlane.f32.xlu0 %v204
    %v206 = vpop.xlane.xlu0 %205
    %v207 = vmul.f32 %v201, 0.00390625
    %v208 = vmul.f32 %v206, 0.00390625
    %v209 = vmul.f32 %v207, %v207
    %v210 = vsub.f32 %v208, %v209
    %v211 = vmax.f32 %v210, 0.0
    %v212 = vsub.f32 %v177, %v207
    %v213 = vsub.f32 %v197, %v207
    %v214 = vadd.f32 %v211, 1e-05
    %v215 = vrsqrt.pop %v214
    %v216 = vmul.f32 %v215, %v214
    %v217 = vmul.f32 %v216, %v215
    %v218 = vmul.f32 0.5, %v217
    %v219 = vsub.f32 1.5, %v218
    %v220 = vmul.f32 %v215, %v219
    %vm221 = vweird.f32 %v214
    %vm222 = vweird.f32 %v215
    %vm223 = vmor %vm221, %vm222
    %v224 = vsel %vm223, %v215, %v220
    %v225 = vmul.f32 %v212, %v224
    %v226 = vmul.f32 %v213, %v224
    %v227 = vld [vmem:[%s3] sm:$0x3]
    %v229 = vperm.slane %v227, 0
    %v230 = vperm.slane %v227, 1
    %v233 = vmul.f32 %v225, %v229
    %v234 = vmul.f32 %v226, %v230
    %v235 = vld [vmem:[#allocation8] sm:$0x3]
    %v237 = vperm.slane %v235, 0
    %v238 = vperm.slane %v235, 1
    %v241 = vadd.f32 %v233, %v237
    %v242 = vadd.f32 %v234, %v238
    %v243 = vmax.f32 %v241, 0.0
    %v244 = vmax.f32 %v242, 0.0
    %v245 = vld [vmem:[#allocation10] sm:$0xff]
    %v246 = vld [vmem:[#allocation10 + $0x8] sm:$0xff]
    %v247 = vld [vmem:[#allocation10 + $0x10] sm:$0xff]
    %v248 = vld [vmem:[#allocation10 + $0x18] sm:$0xff]
    %v249 = vld [vmem:[#allocation10 + $0x20] sm:$0xff]
    %v250 = vld [vmem:[#allocation10 + $0x28] sm:$0xff]
    %v251 = vld [vmem:[#allocation10 + $0x30] sm:$0xff]
    %v252 = vld [vmem:[#allocation10 + $0x38] sm:$0xff]
    %v253 = vld [vmem:[#allocation10 + $0x40] sm:$0xff]
    %v254 = vld [vmem:[#allocation10 + $0x48] sm:$0xff]
    %v255 = vld [vmem:[#allocation10 + $0x50] sm:$0xff]
    %v256 = vld [vmem:[#allocation10 + $0x58] sm:$0xff]
    %v257 = vld [vmem:[#allocation10 + $0x60] sm:$0xff]
    %v258 = vld [vmem:[#allocation10 + $0x68] sm:$0xff]
    %v259 = vld [vmem:[#allocation10 + $0x70] sm:$0xff]
    %v260 = vld [vmem:[#allocation10 + $0x78] sm:$0xff]
    %v261 = vld [vmem:[#allocation10 + $0x80] sm:$0xff]
    %v262 = vld [vmem:[#allocation10 + $0x88] sm:$0xff]
    %v263 = vld [vmem:[#allocation10 + $0x90] sm:$0xff]
    %v264 = vld [vmem:[#allocation10 + $0x98] sm:$0xff]
    %v265 = vld [vmem:[#allocation10 + $0xa0] sm:$0xff]
    %v266 = vld [vmem:[#allocation10 + $0xa8] sm:$0xff]
    %v267 = vld [vmem:[#allocation10 + $0xb0] sm:$0xff]
    %v268 = vld [vmem:[#allocation10 + $0xb8] sm:$0xff]
    %v269 = vld [vmem:[#allocation10 + $0xc0] sm:$0xff]
    %v270 = vld [vmem:[#allocation10 + $0xc8] sm:$0xff]
    %v271 = vld [vmem:[#allocation10 + $0xd0] sm:$0xff]
    %v272 = vld [vmem:[#allocation10 + $0xd8] sm:$0xff]
    %v273 = vld [vmem:[#allocation10 + $0xe0] sm:$0xff]
    %v274 = vld [vmem:[#allocation10 + $0xe8] sm:$0xff]
    %v275 = vld [vmem:[#allocation10 + $0xf0] sm:$0xff]
    %v276 = vld [vmem:[#allocation10 + $0xf8] sm:$0xff]
    %v277 = vld [vmem:[#allocation10 + $0x100] sm:$0xff]
    %v278 = vld [vmem:[#allocation10 + $0x108] sm:$0xff]
    %v279 = vld [vmem:[#allocation10 + $0x110] sm:$0xff]
    %v280 = vld [vmem:[#allocation10 + $0x118] sm:$0xff]
    %v281 = vld [vmem:[#allocation10 + $0x120] sm:$0xff]
    %v282 = vld [vmem:[#allocation10 + $0x128] sm:$0xff]
    %v283 = vld [vmem:[#allocation10 + $0x130] sm:$0xff]
    %v284 = vld [vmem:[#allocation10 + $0x138] sm:$0xff]
    %v285 = vld [vmem:[#allocation10 + $0x140] sm:$0xff]
    %v286 = vld [vmem:[#allocation10 + $0x148] sm:$0xff]
    %v287 = vld [vmem:[#allocation10 + $0x150] sm:$0xff]
    %v288 = vld [vmem:[#allocation10 + $0x158] sm:$0xff]
    %v289 = vld [vmem:[#allocation10 + $0x160] sm:$0xff]
    %v290 = vld [vmem:[#allocation10 + $0x168] sm:$0xff]
    %v291 = vld [vmem:[#allocation10 + $0x170] sm:$0xff]
    %v292 = vld [vmem:[#allocation10 + $0x178] sm:$0xff]
    %v293 = vld [vmem:[#allocation10 + $0x180] sm:$0xff]
    %v294 = vld [vmem:[#allocation10 + $0x188] sm:$0xff]
    %v295 = vld [vmem:[#allocation10 + $0x190] sm:$0xff]
    %v296 = vld [vmem:[#allocation10 + $0x198] sm:$0xff]
    %v297 = vld [vmem:[#allocation10 + $0x1a0] sm:$0xff]
    %v298 = vld [vmem:[#allocation10 + $0x1a8] sm:$0xff]
    %v299 = vld [vmem:[#allocation10 + $0x1b0] sm:$0xff]
    %v300 = vld [vmem:[#allocation10 + $0x1b8] sm:$0xff]
    %v301 = vld [vmem:[#allocation10 + $0x1c0] sm:$0xff]
    %v302 = vld [vmem:[#allocation10 + $0x1c8] sm:$0xff]
    %v303 = vld [vmem:[#allocation10 + $0x1d0] sm:$0xff]
    %v304 = vld [vmem:[#allocation10 + $0x1d8] sm:$0xff]
    %v305 = vld [vmem:[#allocation10 + $0x1e0] sm:$0xff]
    %v306 = vld [vmem:[#allocation10 + $0x1e8] sm:$0xff]
    %v307 = vld [vmem:[#allocation10 + $0x1f0] sm:$0xff]
    %v308 = vld [vmem:[#allocation10 + $0x1f8] sm:$0xff]
    %v309 = vld [vmem:[%s6] sm:$0x3]
    %v311 = vperm.slane %v309, 0
    %v312 = vperm.slane %v309, 1
    %315 = vmatpush.msra.mxu0 %v275
    %316 = vmatpush.msra.mxu0 %v273
    %317 = vmatpush.msra.mxu0 %v271
    %318 = vmatpush.msra.mxu0 %v269
    %319 = vmatpush.msra.mxu0 %v267
    %320 = vmatpush.msra.mxu0 %v265
    %321 = vmatpush.msra.mxu0 %v263
    %322 = vmatpush.msra.mxu0 %v261
    %323 = vmatpush.msra.mxu0 %v259
    %324 = vmatpush.msra.mxu0 %v257
    %325 = vmatpush.msra.mxu0 %v255
    %326 = vmatpush.msra.mxu0 %v253
    %327 = vmatpush.msra.mxu0 %v251
    %328 = vmatpush.msra.mxu0 %v249
    %329 = vmatpush.msra.mxu0 %v247
    %330 = vmatpush.msra.mxu0 %v245
    %331 = vmatmul.f32.gmra.mxu0 %v243
    %v332 = vpop.f32.mrf.mxu0
    %v333 = vadd.f32 %v311, %v332
    %334 = vdwg.mxu0
    %335 = vmatpush.msra.mxu0 %v307
    %336 = vmatpush.msra.mxu0 %v305
    %337 = vmatpush.msra.mxu0 %v303
    %338 = vmatpush.msra.mxu0 %v301
    %339 = vmatpush.msra.mxu0 %v299
    %340 = vmatpush.msra.mxu0 %v297
    %341 = vmatpush.msra.mxu0 %v295
    %342 = vmatpush.msra.mxu0 %v293
    %343 = vmatpush.msra.mxu0 %v291
    %344 = vmatpush.msra.mxu0 %v289
    %345 = vmatpush.msra.mxu0 %v287
    %346 = vmatpush.msra.mxu0 %v285
    %347 = vmatpush.msra.mxu0 %v283
    %348 = vmatpush.msra.mxu0 %v281
    %349 = vmatpush.msra.mxu0 %v279
    %350 = vmatpush.msra.mxu0 %v277
    %351 = vmatmul.f32.gmra.mxu0 %v244
    %v352 = vpop.f32.mrf.mxu0
    %v353 = vadd.f32 %v333, %v352
    %354 = vdwg.mxu0
    %355 = vmatpush.msra.mxu0 %v276
    %356 = vmatpush.msra.mxu0 %v274
    %357 = vmatpush.msra.mxu0 %v272
    %358 = vmatpush.msra.mxu0 %v270
    %359 = vmatpush.msra.mxu0 %v268
    %360 = vmatpush.msra.mxu0 %v266
    %361 = vmatpush.msra.mxu0 %v264
    %362 = vmatpush.msra.mxu0 %v262
    %363 = vmatpush.msra.mxu0 %v260
    %364 = vmatpush.msra.mxu0 %v258
    %365 = vmatpush.msra.mxu0 %v256
    %366 = vmatpush.msra.mxu0 %v254
    %367 = vmatpush.msra.mxu0 %v252
    %368 = vmatpush.msra.mxu0 %v250
    %369 = vmatpush.msra.mxu0 %v248
    %370 = vmatpush.msra.mxu0 %v246
    %371 = vmatmul.f32.gmra.mxu0 %v243
    %v372 = vpop.f32.mrf.mxu0
    %v373 = vadd.f32 %v312, %v372
    %374 = vdwg.mxu0
    %375 = vmatpush.msra.mxu0 %v308
    %376 = vmatpush.msra.mxu0 %v306
    %377 = vmatpush.msra.mxu0 %v304
    %378 = vmatpush.msra.mxu0 %v302
    %379 = vmatpush.msra.mxu0 %v300
    %380 = vmatpush.msra.mxu0 %v298
    %381 = vmatpush.msra.mxu0 %v296
    %382 = vmatpush.msra.mxu0 %v294
    %383 = vmatpush.msra.mxu0 %v292
    %384 = vmatpush.msra.mxu0 %v290
    %385 = vmatpush.msra.mxu0 %v288
    %386 = vmatpush.msra.mxu0 %v286
    %387 = vmatpush.msra.mxu0 %v284
    %388 = vmatpush.msra.mxu0 %v282
    %389 = vmatpush.msra.mxu0 %v280
    %390 = vmatpush.msra.mxu0 %v278
    %391 = vmatmul.f32.gmra.mxu0 %v244
    %v392 = vpop.f32.mrf.mxu0
    %v393 = vadd.f32 %v373, %v392
    %394 = vdwg.mxu0
    %v395 = vadd.f32 %v353, %v393
    %396 = vadd.xlane.f32.xlu0 %v395
    %v397 = vpop.xlane.xlu0 %396
    %v398 = vmul.f32 %v353, %v353
    %v399 = vmul.f32 %v393, %v393
    %v400 = vadd.f32 %v398, %v399
    %401 = vadd.xlane.f32.xlu0 %v400
    %v402 = vpop.xlane.xlu0 %401
    %v403 = vmul.f32 %v397, 0.00390625
    %v404 = vmul.f32 %v402, 0.00390625
    %v405 = vmul.f32 %v403, %v403
    %v406 = vsub.f32 %v404, %v405
    %v407 = vmax.f32 %v406, 0.0
    %v408 = vsub.f32 %v353, %v403
    %v409 = vsub.f32 %v393, %v403
    %v410 = vadd.f32 %v407, 1e-05
    %v411 = vrsqrt.pop %v410
    %v412 = vmul.f32 %v411, %v410
    %v413 = vmul.f32 %v412, %v411
    %v414 = vmul.f32 0.5, %v413
    %v415 = vsub.f32 1.5, %v414
    %v416 = vmul.f32 %v411, %v415
    %vm417 = vweird.f32 %v410
    %vm418 = vweird.f32 %v411
    %vm419 = vmor %vm417, %vm418
    %v420 = vsel %vm419, %v411, %v416
    %v421 = vmul.f32 %v408, %v420
    %v422 = vmul.f32 %v409, %v420
    %v423 = vld [vmem:[%s7] sm:$0x3]
    %v425 = vperm.slane %v423, 0
    %v426 = vperm.slane %v423, 1
    %v429 = vmul.f32 %v421, %v425
    %v430 = vmul.f32 %v422, %v426
    %v431 = vld [vmem:[#allocation11] sm:$0x3]
    %v433 = vperm.slane %v431, 0
    %v434 = vperm.slane %v431, 1
    %v437 = vadd.f32 %v429, %v433
    %v438 = vadd.f32 %v430, %v434
    %v439 = vmax.f32 %v437, 0.0
    %v440 = vmax.f32 %v438, 0.0
    %v441 = vld [vmem:[#allocation13] sm:$0xff]
    %v442 = vld [vmem:[#allocation13 + $0x8] sm:$0xff]
    %v443 = vld [vmem:[#allocation13 + $0x10] sm:$0xff]
    %v444 = vld [vmem:[#allocation13 + $0x18] sm:$0xff]
    %v445 = vld [vmem:[#allocation13 + $0x20] sm:$0xff]
    %v446 = vld [vmem:[#allocation13 + $0x28] sm:$0xff]
    %v447 = vld [vmem:[#allocation13 + $0x30] sm:$0xff]
    %v448 = vld [vmem:[#allocation13 + $0x38] sm:$0xff]
    %v449 = vld [vmem:[#allocation13 + $0x40] sm:$0xff]
    %v450 = vld [vmem:[#allocation13 + $0x48] sm:$0xff]
    %v451 = vld [vmem:[#allocation13 + $0x50] sm:$0xff]
    %v452 = vld [vmem:[#allocation13 + $0x58] sm:$0xff]
    %v453 = vld [vmem:[#allocation13 + $0x60] sm:$0xff]
    %v454 = vld [vmem:[#allocation13 + $0x68] sm:$0xff]
    %v455 = vld [vmem:[#allocation13 + $0x70] sm:$0xff]
    %v456 = vld [vmem:[#allocation13 + $0x78] sm:$0xff]
    %v457 = vld [vmem:[#allocation13 + $0x80] sm:$0xff]
    %v458 = vld [vmem:[#allocation13 + $0x88] sm:$0xff]
    %v459 = vld [vmem:[#allocation13 + $0x90] sm:$0xff]
    %v460 = vld [vmem:[#allocation13 + $0x98] sm:$0xff]
    %v461 = vld [vmem:[#allocation13 + $0xa0] sm:$0xff]
    %v462 = vld [vmem:[#allocation13 + $0xa8] sm:$0xff]
    %v463 = vld [vmem:[#allocation13 + $0xb0] sm:$0xff]
    %v464 = vld [vmem:[#allocation13 + $0xb8] sm:$0xff]
    %v465 = vld [vmem:[#allocation13 + $0xc0] sm:$0xff]
    %v466 = vld [vmem:[#allocation13 + $0xc8] sm:$0xff]
    %v467 = vld [vmem:[#allocation13 + $0xd0] sm:$0xff]
    %v468 = vld [vmem:[#allocation13 + $0xd8] sm:$0xff]
    %v469 = vld [vmem:[#allocation13 + $0xe0] sm:$0xff]
    %v470 = vld [vmem:[#allocation13 + $0xe8] sm:$0xff]
    %v471 = vld [vmem:[#allocation13 + $0xf0] sm:$0xff]
    %v472 = vld [vmem:[#allocation13 + $0xf8] sm:$0xff]
    %v473 = vld [vmem:[%s10] sm:$0x1]
    %v475 = vperm.slane %v473, 0
    %477 = vmatpush.msra.mxu0 %v456
    %478 = vmatpush.msra.mxu0 %v455
    %479 = vmatpush.msra.mxu0 %v454
    %480 = vmatpush.msra.mxu0 %v453
    %481 = vmatpush.msra.mxu0 %v452
    %482 = vmatpush.msra.mxu0 %v451
    %483 = vmatpush.msra.mxu0 %v450
    %484 = vmatpush.msra.mxu0 %v449
    %485 = vmatpush.msra.mxu0 %v448
    %486 = vmatpush.msra.mxu0 %v447
    %487 = vmatpush.msra.mxu0 %v446
    %488 = vmatpush.msra.mxu0 %v445
    %489 = vmatpush.msra.mxu0 %v444
    %490 = vmatpush.msra.mxu0 %v443
    %491 = vmatpush.msra.mxu0 %v442
    %492 = vmatpush.msra.mxu0 %v441
    %493 = vmatmul.f32.gmra.mxu0 %v439
    %v494 = vpop.f32.mrf.mxu0
    %v495 = vadd.f32 %v475, %v494
    %496 = vdwg.mxu0
    %497 = vmatpush.msra.mxu0 %v472
    %498 = vmatpush.msra.mxu0 %v471
    %499 = vmatpush.msra.mxu0 %v470
    %500 = vmatpush.msra.mxu0 %v469
    %501 = vmatpush.msra.mxu0 %v468
    %502 = vmatpush.msra.mxu0 %v467
    %503 = vmatpush.msra.mxu0 %v466
    %504 = vmatpush.msra.mxu0 %v465
    %505 = vmatpush.msra.mxu0 %v464
    %506 = vmatpush.msra.mxu0 %v463
    %507 = vmatpush.msra.mxu0 %v462
    %508 = vmatpush.msra.mxu0 %v461
    %509 = vmatpush.msra.mxu0 %v460
    %510 = vmatpush.msra.mxu0 %v459
    %511 = vmatpush.msra.mxu0 %v458
    %512 = vmatpush.msra.mxu0 %v457
    %513 = vmatmul.f32.gmra.mxu0 %v440
    %v514 = vpop.f32.mrf.mxu0
    %v515 = vadd.f32 %v495, %v514
    %516 = vdwg.mxu0
    %517 = vst [vmem:[#allocation14] sm:$0xff] %v515
    // Predicated region
    $region74: #{rnd_forward.1} parent=1 // pred_check
      _
    $region75: #{rnd_forward.1} parent=1 // pred_check_branch
      %519 = sbr.rel (0) target = $region77
    $region76: #{rnd_forward.1} parent=1 // pred_region
      %521 = vsyncadd [#allocation4], 0
      %s523 = sshll.u32 [#allocation14], 4
      %s524 = int_to_ptr.vmem [resolvable:$true] %s523
      %s525 = sshll.u32 %s11, 4
      %s526 = int_to_ptr.hbm [resolvable:$true] %s525
      %528 = dma.vmem_to_hbm [thread:$0]  %s524, 128, %s526, [#allocation4]
    $region77: #{rnd_forward.1} parent=1 // pred_fallthru
      _
    // Predicated region
    $region78: #{rnd_forward.1} parent=1 // pred_check
      _
    $region79: #{rnd_forward.1} parent=1 // pred_check_branch
      %530 = sbr.rel (0) target = $region81
    $region80: #{rnd_forward.1} parent=1 // pred_region
      %532 = dma.done [#allocation4], 128
    $region81: #{rnd_forward.1} parent=1 // pred_fallthru
      _
    %533 = vsyncpa [#allocation3], 1
    %534 = vsyncpa [#allocation6], 1
    %535 = vsyncpa [#allocation9], 1
    %536 = vsyncpa [#allocation12], 1
    %537 = vsyncpa [#allocation4], 1

</llo_original>
